<compile_context>
chip_gen: v7x
topology: tpu7x:2x2x1
jax: 0.10.0
libtpu: 0.0.40
codegen_flags: <defaults>
</compile_context>

<pallas_src>
import functools

import jax
import jax.numpy as jnp
from jax import lax
from jax.experimental import pallas as pl
from jax.experimental.pallas import tpu as pltpu


def _bce_with_logits(x, y):
    # numerically stable BCEWithLogitsLoss(reduction='none'):
    #   max(x, 0) - x*y + log(1 + exp(-|x|))
    return jnp.maximum(x, 0.0) - x * y + jnp.log1p(jnp.exp(-jnp.abs(x)))


def _world_loss_kernel(length_ref,
                       hasf0_logits_ref, f0_hat_ref, hasf0_ref, f0_ref,
                       logspc_hat_ref, logspc_ref,
                       hascodeap_logits_ref, hascodeap_ref,
                       codeap_hat_ref, codeap_ref,
                       out_ref, *, tile_t, t_total, n_spc, n_codeap):
    B = length_ref.shape[0]
    t0 = pl.program_id(0) * tile_t

    length = length_ref[...]                                     # (B, 1) int32

    # Per-frame validity mask for this time tile. The `< t_total` term also kills
    # any out-of-bounds tail padding of the last tile (NaN-safe: where selects 0,
    # never multiplies garbage).
    fidx = lax.broadcasted_iota(jnp.int32, (B, tile_t), 1) + t0
    valid = (fidx < length) & (fidx < t_total)                   # (B, tile_t) bool

    # ---- scalar-per-frame streams (4 separate (B, tile_t) refs) -------------
    hasf0_logits = hasf0_logits_ref[...].astype(jnp.float32)
    f0_hat = f0_hat_ref[...].astype(jnp.float32)
    hasf0 = hasf0_ref[...].astype(jnp.float32)
    f0 = f0_ref[...].astype(jnp.float32)

    hasf0_loss = jnp.sum(jnp.where(valid, _bce_with_logits(hasf0_logits, hasf0), 0.0))
    f0_diff = f0_hat - f0
    f0_loss = jnp.sum(jnp.where(valid, f0_diff * f0_diff * hasf0, 0.0))

    # ---- logspc streams, lane-dense flat layout (B, tile_t * S) -------------
    # flat index j = frame*S + s, so (frame < L) <=> (j < L*S): no int division.
    # Feature mean is folded into the final 1/S scalar in the wrapper.
    jflat_s = lax.broadcasted_iota(jnp.int32, (B, tile_t * n_spc), 1) + t0 * n_spc
    valid_s = (jflat_s < length * n_spc) & (jflat_s < t_total * n_spc)
    ld = logspc_hat_ref[...].astype(jnp.float32) - logspc_ref[...].astype(jnp.float32)
    logspc_loss = jnp.sum(jnp.where(valid_s, ld * ld, 0.0))

    # ---- codeap streams, lane-dense flat layout (B, tile_t * C) -------------
    jflat_c = lax.broadcasted_iota(jnp.int32, (B, tile_t * n_codeap), 1) + t0 * n_codeap
    valid_c = (jflat_c < length * n_codeap) & (jflat_c < t_total * n_codeap)

    hcl = hascodeap_logits_ref[...].astype(jnp.float32)
    hc = hascodeap_ref[...].astype(jnp.float32)
    hascodeap_loss = jnp.sum(jnp.where(valid_c, _bce_with_logits(hcl, hc), 0.0))

    cd = codeap_hat_ref[...].astype(jnp.float32) - codeap_ref[...].astype(jnp.float32)
    codeap_loss = jnp.sum(jnp.where(valid_c, cd * cd * hc, 0.0))

    # ---- per-chunk partial sums -> lane-dense (1, 1, 128) output row --------
    lane = lax.broadcasted_iota(jnp.int32, (1, 1, 128), 2)
    row = jnp.where(lane == 0, hasf0_loss,
          jnp.where(lane == 1, f0_loss,
          jnp.where(lane == 2, logspc_loss,
          jnp.where(lane == 3, hascodeap_loss,
          jnp.where(lane == 4, codeap_loss, 0.0)))))
    out_ref[...] = row


def _adjust_size(x, y):
    t = min(x.shape[1], y.shape[1])
    return x[:, :t], y[:, :t]


def _round_up(x, m):
    return ((x + m - 1) // m) * m


def _vmem_capacity_bytes():
    # Per-TC VMEM: 64 MiB on v7x, 128 MiB on v5e/v6e. Fall back to the smallest.
    try:
        return int(pltpu.get_tpu_info().vmem_capacity_bytes)
    except Exception:
        return 64 * 1024 * 1024


def world_loss(length, hasf0_logits, f0_hat, logspc_hat, hascodeap_logits, codeap_hat,
               hasf0, f0, logspc, hascodeap, codeap, *, tile_t_override=None):
    # static time-axis trimming (adjust_size) — plain JAX glue
    hasf0_logits, hasf0 = _adjust_size(hasf0_logits, hasf0)
    f0_hat, f0 = _adjust_size(f0_hat, f0)
    logspc_hat, logspc = _adjust_size(logspc_hat, logspc)
    hascodeap_logits, hascodeap = _adjust_size(hascodeap_logits, hascodeap)
    codeap_hat, codeap = _adjust_size(codeap_hat, codeap)

    B, T = f0.shape
    S = logspc.shape[2]
    C = codeap.shape[2]

    # the kernel shares one padding mask -> all pairs must trim to the same T
    assert (hasf0_logits.shape[1] == T and logspc_hat.shape[1] == T
            and hascodeap_logits.shape[1] == T and codeap_hat.shape[1] == T), \
        "all WORLD streams must trim to the same time length"

    # Lane-dense flat layouts (contiguous reshape, no data movement) for both the
    # wide logspc streams and the narrow codeap streams.
    logspc_hat_f = logspc_hat.reshape(B, T * S)
    logspc_f = logspc.reshape(B, T * S)
    hascodeap_logits_f = hascodeap_logits.reshape(B, T * C)
    hascodeap_f = hascodeap.reshape(B, T * C)
    codeap_hat_f = codeap_hat.reshape(B, T * C)
    codeap_f = codeap.reshape(B, T * C)

    length_i = length.astype(jnp.int32).reshape(B, 1)

    # ---- per-generation VMEM budget ----------------------------------------
    vmem_cap = _vmem_capacity_bytes()
    vmem_limit = min(vmem_cap - 8 * 1024 * 1024, 100 * 1024 * 1024)  # ~56 MiB v7x, ~100 MiB v5e/v6e

    scalar_streams = (hasf0_logits, f0_hat, hasf0, f0)
    spc_streams = (logspc_hat_f, logspc_f)
    cap_streams = (hascodeap_logits_f, hascodeap_f, codeap_hat_f, codeap_f)

    in_bytes_per_frame = B * (sum(x.dtype.itemsize for x in scalar_streams)
                              + S * sum(x.dtype.itemsize for x in spc_streams)
                              + C * sum(x.dtype.itemsize for x in cap_streams))
    elems_per_frame = B * (4 + 2 * S + 4 * C)
    # live VMEM per frame: 2x-buffered input blocks + ~3 f32 temporaries per element
    # (casts / diffs / where results the kernel materializes on top of the inputs)
    live_bytes_per_frame = 2 * in_bytes_per_frame + 3 * 4 * elems_per_frame
    live_budget = int(vmem_limit * 0.85)

    # ---- time-tile size ------------------------------------------------------
    if tile_t_override is not None:
        tile_t = tile_t_override
    elif T <= 128:
        tile_t = T                            # single step, blocks == full arrays
    else:
        fit = max(1, live_budget // max(1, live_bytes_per_frame))
        # cap so num_chunks >= 2: lets the "parallel" axis shard over v7x's 2 TCs
        half = _round_up(pl.cdiv(T, 2), 128)
        tile_t = min(fit, half, T)
        # TODO(synk): 128-frame floor can exceed the VMEM budget for extreme B*S
        # (e.g. huge batch with S~513); reconcile the floor with the budget then.
        tile_t = max(128, (tile_t // 128) * 128)
    num_chunks = pl.cdiv(T, tile_t)

    blk_map = lambda t: (0, t)
    in_specs = [
        pl.BlockSpec((B, 1), lambda t: (0, 0)),        # length (int32)
        pl.BlockSpec((B, tile_t), blk_map),            # hasf0_logits
        pl.BlockSpec((B, tile_t), blk_map),            # f0_hat
        pl.BlockSpec((B, tile_t), blk_map),            # hasf0
        pl.BlockSpec((B, tile_t), blk_map),            # f0
        pl.BlockSpec((B, tile_t * S), blk_map),        # logspc_hat (flat, lane-dense)
        pl.BlockSpec((B, tile_t * S), blk_map),        # logspc (flat)
        pl.BlockSpec((B, tile_t * C), blk_map),        # hascodeap_logits (flat)
        pl.BlockSpec((B, tile_t * C), blk_map),        # hascodeap (flat)
        pl.BlockSpec((B, tile_t * C), blk_map),        # codeap_hat (flat)
        pl.BlockSpec((B, tile_t * C), blk_map),        # codeap (flat)
    ]
    out_spec = pl.BlockSpec((1, 1, 128), lambda t: (t, 0, 0))

    all_streams = (length_i,) + scalar_streams + spc_streams + cap_streams
    in_bytes = sum(int(x.size) * x.dtype.itemsize for x in all_streams)
    cost = pl.CostEstimate(
        flops=int(B * T * (30 + 6 * S + 14 * C)),
        transcendentals=int(2 * B * T * (1 + C)),
        bytes_accessed=int(in_bytes + num_chunks * 128 * 4),
    )

    kernel = functools.partial(_world_loss_kernel, tile_t=tile_t, t_total=T,
                               n_spc=S, n_codeap=C)
    partials = pl.pallas_call(
        kernel,
        out_shape=jax.ShapeDtypeStruct((num_chunks, 1, 128), jnp.float32),
        grid=(num_chunks,),
        in_specs=in_specs,
        out_specs=out_spec,
        compiler_params=pltpu.CompilerParams(
            dimension_semantics=("parallel",),   # independent chunks -> megacore on v7x
            vmem_limit_bytes=int(vmem_limit)),
        cost_estimate=cost,
    )(length_i, hasf0_logits, f0_hat, hasf0, f0,
      logspc_hat_f, logspc_f,
      hascodeap_logits_f, hascodeap_f, codeap_hat_f, codeap_f)

    # tiny finalize in plain JAX: sum partial chunks, normalize, fold 1/S and 1/C
    sums = jnp.sum(partials, axis=(0, 1))                     # (128,) f32
    denom = jnp.sum(jnp.clip(length.astype(jnp.float32), 0.0, float(T)))
    # TODO(synk): denom == 0 (all lengths zero) divides by zero, same as the reference.
    hasf0_loss = sums[0] / denom
    f0_loss = sums[1] / denom
    logspc_loss = sums[2] / (denom * S)
    hascodeap_loss = sums[3] / (denom * C)
    codeap_loss = sums[4] / (denom * C)
    return hasf0_loss, f0_loss, logspc_loss, hascodeap_loss, codeap_loss


def world_loss_reference(length, hasf0_logits, f0_hat, logspc_hat, hascodeap_logits,
                         codeap_hat, hasf0, f0, logspc, hascodeap, codeap):
    hasf0_logits, hasf0 = _adjust_size(hasf0_logits, hasf0)
    f0_hat, f0 = _adjust_size(f0_hat, f0)
    logspc_hat, logspc = _adjust_size(logspc_hat, logspc)
    hascodeap_logits, hascodeap = _adjust_size(hascodeap_logits, hascodeap)
    codeap_hat, codeap = _adjust_size(codeap_hat, codeap)

    mask = (jnp.arange(f0.shape[1])[None, :] < length[:, None]).astype(jnp.float32)
    hasf0_loss = jnp.sum(_bce_with_logits(hasf0_logits, hasf0) * mask)
    f0_loss = jnp.sum((f0_hat - f0) ** 2 * hasf0 * mask)
    logspc_loss = jnp.sum(jnp.mean((logspc_hat - logspc) ** 2, axis=2) * mask)
    hascodeap_loss = jnp.sum(jnp.mean(_bce_with_logits(hascodeap_logits, hascodeap), axis=2) * mask)
    codeap_loss = jnp.sum(jnp.mean((codeap_hat - codeap) ** 2 * hascodeap, axis=2) * mask)
    ms = jnp.sum(mask)
    return (hasf0_loss / ms, f0_loss / ms, logspc_loss / ms,
            hascodeap_loss / ms, codeap_loss / ms)


if __name__ == "__main__":
    key = jax.random.PRNGKey(0)

    def make_inputs(k, B, T_pred, T_tgt, S, C, lengths):
        ks = jax.random.split(k, 10)
        length = jnp.asarray(lengths, dtype=jnp.int32)
        hasf0_logits = jax.random.normal(ks[0], (B, T_pred), jnp.float32)
        f0_hat = jax.random.normal(ks[1], (B, T_pred), jnp.float32)
        logspc_hat = jax.random.normal(ks[2], (B, T_pred, S), jnp.float32)
        hascodeap_logits = jax.random.normal(ks[3], (B, T_pred, C), jnp.float32)
        codeap_hat = jax.random.normal(ks[4], (B, T_pred, C), jnp.float32)
        hasf0 = jax.random.bernoulli(ks[5], 0.7, (B, T_tgt)).astype(jnp.float32)
        f0 = jax.random.normal(ks[6], (B, T_tgt), jnp.float32)
        logspc = jax.random.normal(ks[7], (B, T_tgt, S), jnp.float32)
        hascodeap = jax.random.bernoulli(ks[8], 0.5, (B, T_tgt, C)).astype(jnp.float32)
        codeap = jax.random.normal(ks[9], (B, T_tgt, C), jnp.float32)
        return (length, hasf0_logits, f0_hat, logspc_hat, hascodeap_logits, codeap_hat,
                hasf0, f0, logspc, hascodeap, codeap)

    k1, k2 = jax.random.split(key)

    # 1) small shapes, single tile (predictions longer -> exercises adjust_size)
    args1 = make_inputs(k1, B=2, T_pred=10, T_tgt=8, S=32, C=4, lengths=[8, 5])
    out1 = jax.block_until_ready(jax.jit(world_loss)(*args1))
    ref1 = world_loss_reference(*args1)
    for o, r in zip(out1, ref1):
        assert jnp.allclose(o, r, atol=1e-5, rtol=1e-4), (o, r)

    # 2) multi-chunk path: force tile_t=128 over T=320 (grid + OOB tail masking)
    args2 = make_inputs(k2, B=2, T_pred=321, T_tgt=320, S=64, C=2, lengths=[300, 150])
    f2 = jax.jit(functools.partial(world_loss, tile_t_override=128))
    out2 = jax.block_until_ready(f2(*args2))
    ref2 = world_loss_reference(*args2)
    for o, r in zip(out2, ref2):
        assert jnp.allclose(o, r, atol=1e-5, rtol=1e-4), (o, r)

    # 3) auto tile selection on T>128 (exercises the >=2-chunks megacore path)
    out3 = jax.block_until_ready(jax.jit(world_loss)(*args2))
    for o, r in zip(out3, ref2):
        assert jnp.allclose(o, r, atol=1e-5, rtol=1e-4), (o, r)

    print("KERNEL_OK")
</pallas_src>

<mosaic_0001>
module attributes {stable_mosaic.version = 11 : i64} {
  func.func @_world_loss_kernel(%arg0: i32, %arg1: memref<2x1xi32, #tpu.memory_space<vmem>>, %arg2: memref<2x8xf32, #tpu.memory_space<vmem>>, %arg3: memref<2x8xf32, #tpu.memory_space<vmem>>, %arg4: memref<2x8xf32, #tpu.memory_space<vmem>>, %arg5: memref<2x8xf32, #tpu.memory_space<vmem>>, %arg6: memref<2x256xf32, #tpu.memory_space<vmem>>, %arg7: memref<2x256xf32, #tpu.memory_space<vmem>>, %arg8: memref<2x32xf32, #tpu.memory_space<vmem>>, %arg9: memref<2x32xf32, #tpu.memory_space<vmem>>, %arg10: memref<2x32xf32, #tpu.memory_space<vmem>>, %arg11: memref<2x32xf32, #tpu.memory_space<vmem>>, %arg12: memref<1x1x128xf32, #tpu.memory_space<vmem>>) attributes {dimension_semantics = [#tpu.dimension_semantics<parallel>], iteration_bounds = array<i64: 1>, scalar_prefetch = 0 : i64, scratch_operands = 0 : i64, tpu.core_type = #tpu.core_type<tc>, window_params = [{pipeline_mode = #tpu.pipeline_mode<synchronous>, transform_indices = @transform_0, window_bounds = array<i64: 2, 1>}, {transform_indices = @transform_1, window_bounds = array<i64: 2, 8>}, {transform_indices = @transform_2, window_bounds = array<i64: 2, 8>}, {transform_indices = @transform_3, window_bounds = array<i64: 2, 8>}, {transform_indices = @transform_4, window_bounds = array<i64: 2, 8>}, {transform_indices = @transform_5, window_bounds = array<i64: 2, 256>}, {transform_indices = @transform_6, window_bounds = array<i64: 2, 256>}, {transform_indices = @transform_7, window_bounds = array<i64: 2, 32>}, {transform_indices = @transform_8, window_bounds = array<i64: 2, 32>}, {transform_indices = @transform_9, window_bounds = array<i64: 2, 32>}, {transform_indices = @transform_10, window_bounds = array<i64: 2, 32>}, {transform_indices = @transform_11, window_bounds = array<i64: 1, 1, 128>}]} {
    %c8_i32 = arith.constant 8 : i32
    %0 = arith.muli %arg0, %c8_i32 : i32
    %c0 = arith.constant 0 : index
    %c0_0 = arith.constant 0 : index
    %1 = vector.load %arg1[%c0, %c0_0] : memref<2x1xi32, #tpu.memory_space<vmem>>, vector<2x1xi32>
    %2 = tpu.iota {dimensions = array<i32: 1>} : vector<2x8xi32>
    %3 = vector.broadcast %0 : i32 to vector<2x8xi32>
    %4 = arith.addi %2, %3 : vector<2x8xi32>
    %5 = vector.broadcast %1 : vector<2x1xi32> to vector<2x8xi32>
    %6 = arith.cmpi slt, %4, %5 : vector<2x8xi32>
    %c8_i32_1 = arith.constant 8 : i32
    %7 = vector.broadcast %c8_i32_1 : i32 to vector<2x8xi32>
    %8 = arith.cmpi slt, %4, %7 : vector<2x8xi32>
    %9 = arith.andi %6, %8 : vector<2x8xi1>
    %c0_2 = arith.constant 0 : index
    %c0_3 = arith.constant 0 : index
    %10 = vector.load %arg2[%c0_2, %c0_3] : memref<2x8xf32, #tpu.memory_space<vmem>>, vector<2x8xf32>
    %c0_4 = arith.constant 0 : index
    %c0_5 = arith.constant 0 : index
    %11 = vector.load %arg3[%c0_4, %c0_5] : memref<2x8xf32, #tpu.memory_space<vmem>>, vector<2x8xf32>
    %c0_6 = arith.constant 0 : index
    %c0_7 = arith.constant 0 : index
    %12 = vector.load %arg4[%c0_6, %c0_7] : memref<2x8xf32, #tpu.memory_space<vmem>>, vector<2x8xf32>
    %c0_8 = arith.constant 0 : index
    %c0_9 = arith.constant 0 : index
    %13 = vector.load %arg5[%c0_8, %c0_9] : memref<2x8xf32, #tpu.memory_space<vmem>>, vector<2x8xf32>
    %cst = arith.constant 0.000000e+00 : f32
    %14 = vector.broadcast %cst : f32 to vector<2x8xf32>
    %15 = arith.maximumf %10, %14 : vector<2x8xf32>
    %16 = arith.mulf %10, %12 : vector<2x8xf32>
    %17 = arith.subf %15, %16 : vector<2x8xf32>
    %18 = math.absf %10 : vector<2x8xf32>
    %cst_10 = arith.constant 0.000000e+00 : f32
    %19 = vector.broadcast %cst_10 : f32 to vector<2x8xf32>
    %20 = arith.subf %19, %18 : vector<2x8xf32>
    %21 = math.exp %20 : vector<2x8xf32>
    %22 = math.log1p %21 : vector<2x8xf32>
    %23 = arith.addf %17, %22 : vector<2x8xf32>
    %cst_11 = arith.constant 0.000000e+00 : f32
    %24 = vector.broadcast %cst_11 : f32 to vector<2x8xf32>
    %25 = arith.select %9, %23, %24 : vector<2x8xi1>, vector<2x8xf32>
    %26 = vector.shape_cast %25 : vector<2x8xf32> to vector<1x2x8xf32>
    %cst_12 = arith.constant dense<0.000000e+00> : vector<1xf32>
    %27 = vector.multi_reduction <add>, %26, %cst_12 [1, 2] : vector<1x2x8xf32> to vector<1xf32>
    %28 = vector.shape_cast %27 : vector<1xf32> to vector<1x1x1xf32>
    %29 = vector.extract %28[0, 0, 0] : f32 from vector<1x1x1xf32>
    %30 = arith.subf %11, %13 : vector<2x8xf32>
    %31 = arith.mulf %30, %30 : vector<2x8xf32>
    %32 = arith.mulf %31, %12 : vector<2x8xf32>
    %cst_13 = arith.constant 0.000000e+00 : f32
    %33 = vector.broadcast %cst_13 : f32 to vector<2x8xf32>
    %34 = arith.select %9, %32, %33 : vector<2x8xi1>, vector<2x8xf32>
    %35 = vector.shape_cast %34 : vector<2x8xf32> to vector<1x2x8xf32>
    %cst_14 = arith.constant dense<0.000000e+00> : vector<1xf32>
    %36 = vector.multi_reduction <add>, %35, %cst_14 [1, 2] : vector<1x2x8xf32> to vector<1xf32>
    %37 = vector.shape_cast %36 : vector<1xf32> to vector<1x1x1xf32>
    %38 = vector.extract %37[0, 0, 0] : f32 from vector<1x1x1xf32>
    %39 = tpu.iota {dimensions = array<i32: 1>} : vector<2x256xi32>
    %c32_i32 = arith.constant 32 : i32
    %40 = arith.muli %0, %c32_i32 : i32
    %41 = vector.broadcast %40 : i32 to vector<2x256xi32>
    %42 = arith.addi %39, %41 : vector<2x256xi32>
    %c32_i32_15 = arith.constant 32 : i32
    %43 = vector.broadcast %c32_i32_15 : i32 to vector<2x1xi32>
    %44 = arith.muli %1, %43 : vector<2x1xi32>
    %45 = vector.broadcast %44 : vector<2x1xi32> to vector<2x256xi32>
    %46 = arith.cmpi slt, %42, %45 : vector<2x256xi32>
    %c256_i32 = arith.constant 256 : i32
    %47 = vector.broadcast %c256_i32 : i32 to vector<2x256xi32>
    %48 = arith.cmpi slt, %42, %47 : vector<2x256xi32>
    %49 = arith.andi %46, %48 : vector<2x256xi1>
    %c0_16 = arith.constant 0 : index
    %c0_17 = arith.constant 0 : index
    %50 = vector.load %arg6[%c0_16, %c0_17] : memref<2x256xf32, #tpu.memory_space<vmem>>, vector<2x256xf32>
    %c0_18 = arith.constant 0 : index
    %c0_19 = arith.constant 0 : index
    %51 = vector.load %arg7[%c0_18, %c0_19] : memref<2x256xf32, #tpu.memory_space<vmem>>, vector<2x256xf32>
    %52 = arith.subf %50, %51 : vector<2x256xf32>
    %53 = arith.mulf %52, %52 : vector<2x256xf32>
    %cst_20 = arith.constant 0.000000e+00 : f32
    %54 = vector.broadcast %cst_20 : f32 to vector<2x256xf32>
    %55 = arith.select %49, %53, %54 : vector<2x256xi1>, vector<2x256xf32>
    %56 = vector.shape_cast %55 : vector<2x256xf32> to vector<1x2x256xf32>
    %cst_21 = arith.constant dense<0.000000e+00> : vector<1xf32>
    %57 = vector.multi_reduction <add>, %56, %cst_21 [1, 2] : vector<1x2x256xf32> to vector<1xf32>
    %58 = vector.shape_cast %57 : vector<1xf32> to vector<1x1x1xf32>
    %59 = vector.extract %58[0, 0, 0] : f32 from vector<1x1x1xf32>
    %60 = tpu.iota {dimensions = array<i32: 1>} : vector<2x32xi32>
    %c4_i32 = arith.constant 4 : i32
    %61 = arith.muli %0, %c4_i32 : i32
    %62 = vector.broadcast %61 : i32 to vector<2x32xi32>
    %63 = arith.addi %60, %62 : vector<2x32xi32>
    %c4_i32_22 = arith.constant 4 : i32
    %64 = vector.broadcast %c4_i32_22 : i32 to vector<2x1xi32>
    %65 = arith.muli %1, %64 : vector<2x1xi32>
    %66 = vector.broadcast %65 : vector<2x1xi32> to vector<2x32xi32>
    %67 = arith.cmpi slt, %63, %66 : vector<2x32xi32>
    %c32_i32_23 = arith.constant 32 : i32
    %68 = vector.broadcast %c32_i32_23 : i32 to vector<2x32xi32>
    %69 = arith.cmpi slt, %63, %68 : vector<2x32xi32>
    %70 = arith.andi %67, %69 : vector<2x32xi1>
    %c0_24 = arith.constant 0 : index
    %c0_25 = arith.constant 0 : index
    %71 = vector.load %arg8[%c0_24, %c0_25] : memref<2x32xf32, #tpu.memory_space<vmem>>, vector<2x32xf32>
    %c0_26 = arith.constant 0 : index
    %c0_27 = arith.constant 0 : index
    %72 = vector.load %arg9[%c0_26, %c0_27] : memref<2x32xf32, #tpu.memory_space<vmem>>, vector<2x32xf32>
    %cst_28 = arith.constant 0.000000e+00 : f32
    %73 = vector.broadcast %cst_28 : f32 to vector<2x32xf32>
    %74 = arith.maximumf %71, %73 : vector<2x32xf32>
    %75 = arith.mulf %71, %72 : vector<2x32xf32>
    %76 = arith.subf %74, %75 : vector<2x32xf32>
    %77 = math.absf %71 : vector<2x32xf32>
    %cst_29 = arith.constant 0.000000e+00 : f32
    %78 = vector.broadcast %cst_29 : f32 to vector<2x32xf32>
    %79 = arith.subf %78, %77 : vector<2x32xf32>
    %80 = math.exp %79 : vector<2x32xf32>
    %81 = math.log1p %80 : vector<2x32xf32>
    %82 = arith.addf %76, %81 : vector<2x32xf32>
    %cst_30 = arith.constant 0.000000e+00 : f32
    %83 = vector.broadcast %cst_30 : f32 to vector<2x32xf32>
    %84 = arith.select %70, %82, %83 : vector<2x32xi1>, vector<2x32xf32>
    %85 = vector.shape_cast %84 : vector<2x32xf32> to vector<1x2x32xf32>
    %cst_31 = arith.constant dense<0.000000e+00> : vector<1xf32>
    %86 = vector.multi_reduction <add>, %85, %cst_31 [1, 2] : vector<1x2x32xf32> to vector<1xf32>
    %87 = vector.shape_cast %86 : vector<1xf32> to vector<1x1x1xf32>
    %88 = vector.extract %87[0, 0, 0] : f32 from vector<1x1x1xf32>
    %c0_32 = arith.constant 0 : index
    %c0_33 = arith.constant 0 : index
    %89 = vector.load %arg10[%c0_32, %c0_33] : memref<2x32xf32, #tpu.memory_space<vmem>>, vector<2x32xf32>
    %c0_34 = arith.constant 0 : index
    %c0_35 = arith.constant 0 : index
    %90 = vector.load %arg11[%c0_34, %c0_35] : memref<2x32xf32, #tpu.memory_space<vmem>>, vector<2x32xf32>
    %91 = arith.subf %89, %90 : vector<2x32xf32>
    %92 = arith.mulf %91, %91 : vector<2x32xf32>
    %93 = arith.mulf %92, %72 : vector<2x32xf32>
    %cst_36 = arith.constant 0.000000e+00 : f32
    %94 = vector.broadcast %cst_36 : f32 to vector<2x32xf32>
    %95 = arith.select %70, %93, %94 : vector<2x32xi1>, vector<2x32xf32>
    %96 = vector.shape_cast %95 : vector<2x32xf32> to vector<1x2x32xf32>
    %cst_37 = arith.constant dense<0.000000e+00> : vector<1xf32>
    %97 = vector.multi_reduction <add>, %96, %cst_37 [1, 2] : vector<1x2x32xf32> to vector<1xf32>
    %98 = vector.shape_cast %97 : vector<1xf32> to vector<1x1x1xf32>
    %99 = vector.extract %98[0, 0, 0] : f32 from vector<1x1x1xf32>
    %100 = tpu.iota {dimensions = array<i32: 2>} : vector<1x1x128xi32>
    %c0_i32 = arith.constant 0 : i32
    %101 = vector.broadcast %c0_i32 : i32 to vector<1x1x128xi32>
    %102 = arith.cmpi eq, %100, %101 : vector<1x1x128xi32>
    %c1_i32 = arith.constant 1 : i32
    %103 = vector.broadcast %c1_i32 : i32 to vector<1x1x128xi32>
    %104 = arith.cmpi eq, %100, %103 : vector<1x1x128xi32>
    %c2_i32 = arith.constant 2 : i32
    %105 = vector.broadcast %c2_i32 : i32 to vector<1x1x128xi32>
    %106 = arith.cmpi eq, %100, %105 : vector<1x1x128xi32>
    %c3_i32 = arith.constant 3 : i32
    %107 = vector.broadcast %c3_i32 : i32 to vector<1x1x128xi32>
    %108 = arith.cmpi eq, %100, %107 : vector<1x1x128xi32>
    %c4_i32_38 = arith.constant 4 : i32
    %109 = vector.broadcast %c4_i32_38 : i32 to vector<1x1x128xi32>
    %110 = arith.cmpi eq, %100, %109 : vector<1x1x128xi32>
    %cst_39 = arith.constant 0.000000e+00 : f32
    %111 = vector.broadcast %99 : f32 to vector<1x1x128xf32>
    %112 = vector.broadcast %cst_39 : f32 to vector<1x1x128xf32>
    %113 = arith.select %110, %111, %112 : vector<1x1x128xi1>, vector<1x1x128xf32>
    %114 = vector.broadcast %88 : f32 to vector<1x1x128xf32>
    %115 = arith.select %108, %114, %113 : vector<1x1x128xi1>, vector<1x1x128xf32>
    %116 = vector.broadcast %59 : f32 to vector<1x1x128xf32>
    %117 = arith.select %106, %116, %115 : vector<1x1x128xi1>, vector<1x1x128xf32>
    %118 = vector.broadcast %38 : f32 to vector<1x1x128xf32>
    %119 = arith.select %104, %118, %117 : vector<1x1x128xi1>, vector<1x1x128xf32>
    %120 = vector.broadcast %29 : f32 to vector<1x1x128xf32>
    %121 = arith.select %102, %120, %119 : vector<1x1x128xi1>, vector<1x1x128xf32>
    %c0_40 = arith.constant 0 : index
    %c0_41 = arith.constant 0 : index
    %c0_42 = arith.constant 0 : index
    %122 = vector.load %arg12[%c0_40, %c0_41, %c0_42] : memref<1x1x128xf32, #tpu.memory_space<vmem>>, vector<1x1x128xf32>
    tpu.vector_store %arg12[%c0_40, %c0_41, %c0_42], %121 {strides = array<i32>} : memref<1x1x128xf32, #tpu.memory_space<vmem>>, vector<1x1x128xf32>,
    return
  }
  func.func @transform_0(%arg0: i32) -> (i32, i32) {
    %c0_i32 = arith.constant 0 : i32
    %c0_i32_0 = arith.constant 0 : i32
    %c0_i32_1 = arith.constant 0 : i32
    return %c0_i32, %c0_i32_0 : i32, i32
  }
  func.func @transform_1(%arg0: i32) -> (i32, i32) {
    %c0_i32 = arith.constant 0 : i32
    %c0_i32_0 = arith.constant 0 : i32
    return %c0_i32, %arg0 : i32, i32
  }
  func.func @transform_2(%arg0: i32) -> (i32, i32) {
    %c0_i32 = arith.constant 0 : i32
    %c0_i32_0 = arith.constant 0 : i32
    return %c0_i32, %arg0 : i32, i32
  }
  func.func @transform_3(%arg0: i32) -> (i32, i32) {
    %c0_i32 = arith.constant 0 : i32
    %c0_i32_0 = arith.constant 0 : i32
    return %c0_i32, %arg0 : i32, i32
  }
  func.func @transform_4(%arg0: i32) -> (i32, i32) {
    %c0_i32 = arith.constant 0 : i32
    %c0_i32_0 = arith.constant 0 : i32
    return %c0_i32, %arg0 : i32, i32
  }
  func.func @transform_5(%arg0: i32) -> (i32, i32) {
    %c0_i32 = arith.constant 0 : i32
    %c0_i32_0 = arith.constant 0 : i32
    return %c0_i32, %arg0 : i32, i32
  }
  func.func @transform_6(%arg0: i32) -> (i32, i32) {
    %c0_i32 = arith.constant 0 : i32
    %c0_i32_0 = arith.constant 0 : i32
    return %c0_i32, %arg0 : i32, i32
  }
  func.func @transform_7(%arg0: i32) -> (i32, i32) {
    %c0_i32 = arith.constant 0 : i32
    %c0_i32_0 = arith.constant 0 : i32
    return %c0_i32, %arg0 : i32, i32
  }
  func.func @transform_8(%arg0: i32) -> (i32, i32) {
    %c0_i32 = arith.constant 0 : i32
    %c0_i32_0 = arith.constant 0 : i32
    return %c0_i32, %arg0 : i32, i32
  }
  func.func @transform_9(%arg0: i32) -> (i32, i32) {
    %c0_i32 = arith.constant 0 : i32
    %c0_i32_0 = arith.constant 0 : i32
    return %c0_i32, %arg0 : i32, i32
  }
  func.func @transform_10(%arg0: i32) -> (i32, i32) {
    %c0_i32 = arith.constant 0 : i32
    %c0_i32_0 = arith.constant 0 : i32
    return %c0_i32, %arg0 : i32, i32
  }
  func.func @transform_11(%arg0: i32) -> (i32, i32, i32) {
    %c0_i32 = arith.constant 0 : i32
    %c0_i32_0 = arith.constant 0 : i32
    %c0_i32_1 = arith.constant 0 : i32
    return %arg0, %c0_i32, %c0_i32_0 : i32, i32, i32
  }
}

</mosaic_0001>

<llo_original>
// kernel: world_loss.1
$region0: #{world_loss.1}
  #allocation0 [shape = 'u32[]', space=smem, size = 0x4, offset = 0x4, fixed_abs, tag = 'smem constant byte address 0x4 - core index']
  #allocation1 [shape = 'u32[144,128]{1,0:T(1,128)}', space=vmem, size = 0x12000, scoped, tag = 'internal scratch']
  %s0 = inlined_call_operand.vmem [shape: s32[2,1], index: 0, kind: input, shape index: {}]
  %s1 = inlined_call_operand.vmem [shape: f32[2,8], index: 1, kind: input, shape index: {}]
  %s2 = inlined_call_operand.vmem [shape: f32[2,8], index: 2, kind: input, shape index: {}]
  %s3 = inlined_call_operand.vmem [shape: f32[2,8], index: 3, kind: input, shape index: {}]
  %s4 = inlined_call_operand.vmem [shape: f32[2,8], index: 4, kind: input, shape index: {}]
  %s5 = inlined_call_operand.vmem [shape: f32[2,256], index: 5, kind: input, shape index: {}]
  %s6 = inlined_call_operand.vmem [shape: f32[2,256], index: 6, kind: input, shape index: {}]
  %s7 = inlined_call_operand.vmem [shape: f32[2,32], index: 7, kind: input, shape index: {}]
  %s8 = inlined_call_operand.vmem [shape: f32[2,32], index: 8, kind: input, shape index: {}]
  %s9 = inlined_call_operand.vmem [shape: f32[2,32], index: 9, kind: input, shape index: {}]
  %s10 = inlined_call_operand.vmem [shape: f32[2,32], index: 10, kind: input, shape index: {}]
  %s11 = inlined_call_operand.vmem [shape: f32[1,1,128], index: 11, kind: output, shape index: {}]
  %s12 = sld [smem:[#allocation0]]
  $region54: #{world_loss.1} parent=0
    _
  %s14 = ssub.s32 1, %s12
  %s15 = scalar_select 0, %s14, %s12
  // Predicated region
  $region2: #{world_loss.1} parent=0 // pred_check
    _
  $region3: #{world_loss.1} parent=0 // pred_check_branch
    %17 = sbr.rel (0) target = $region5
  $region4: #{world_loss.1} parent=0 // pred_region
    _
  $region5: #{world_loss.1} parent=0 // pred_fallthru
    _
  // Predicated region
  $region6: #{world_loss.1} parent=0 // pred_check
    _
  $region7: #{world_loss.1} parent=0 // pred_check_branch
    %19 = sbr.rel (0) target = $region9
  $region8: #{world_loss.1} parent=0 // pred_region
    _
  $region9: #{world_loss.1} parent=0 // pred_fallthru
    _
  // Predicated region
  $region10: #{world_loss.1} parent=0 // pred_check
    _
  $region11: #{world_loss.1} parent=0 // pred_check_branch
    %21 = sbr.rel (0) target = $region13
  $region12: #{world_loss.1} parent=0 // pred_region
    _
  $region13: #{world_loss.1} parent=0 // pred_fallthru
    _
  // Predicated region
  $region14: #{world_loss.1} parent=0 // pred_check
    _
  $region15: #{world_loss.1} parent=0 // pred_check_branch
    %23 = sbr.rel (0) target = $region17
  $region16: #{world_loss.1} parent=0 // pred_region
    _
  $region17: #{world_loss.1} parent=0 // pred_fallthru
    _
  // Predicated region
  $region18: #{world_loss.1} parent=0 // pred_check
    _
  $region19: #{world_loss.1} parent=0 // pred_check_branch
    %25 = sbr.rel (0) target = $region21
  $region20: #{world_loss.1} parent=0 // pred_region
    _
  $region21: #{world_loss.1} parent=0 // pred_fallthru
    _
  // Predicated region
  $region22: #{world_loss.1} parent=0 // pred_check
    _
  $region23: #{world_loss.1} parent=0 // pred_check_branch
    %27 = sbr.rel (0) target = $region25
  $region24: #{world_loss.1} parent=0 // pred_region
    _
  $region25: #{world_loss.1} parent=0 // pred_fallthru
    _
  // Predicated region
  $region26: #{world_loss.1} parent=0 // pred_check
    _
  $region27: #{world_loss.1} parent=0 // pred_check_branch
    %29 = sbr.rel (0) target = $region29
  $region28: #{world_loss.1} parent=0 // pred_region
    _
  $region29: #{world_loss.1} parent=0 // pred_fallthru
    _
  // Predicated region
  $region30: #{world_loss.1} parent=0 // pred_check
    _
  $region31: #{world_loss.1} parent=0 // pred_check_branch
    %31 = sbr.rel (0) target = $region33
  $region32: #{world_loss.1} parent=0 // pred_region
    _
  $region33: #{world_loss.1} parent=0 // pred_fallthru
    _
  // Predicated region
  $region34: #{world_loss.1} parent=0 // pred_check
    _
  $region35: #{world_loss.1} parent=0 // pred_check_branch
    %33 = sbr.rel (0) target = $region37
  $region36: #{world_loss.1} parent=0 // pred_region
    _
  $region37: #{world_loss.1} parent=0 // pred_fallthru
    _
  // Predicated region
  $region38: #{world_loss.1} parent=0 // pred_check
    _
  $region39: #{world_loss.1} parent=0 // pred_check_branch
    %35 = sbr.rel (0) target = $region41
  $region40: #{world_loss.1} parent=0 // pred_region
    _
  $region41: #{world_loss.1} parent=0 // pred_fallthru
    _
  // Predicated region
  $region42: #{world_loss.1} parent=0 // pred_check
    _
  $region43: #{world_loss.1} parent=0 // pred_check_branch
    %37 = sbr.rel (0) target = $region45
  $region44: #{world_loss.1} parent=0 // pred_region
    _
  $region45: #{world_loss.1} parent=0 // pred_fallthru
    _
  %s38 = smul.u32 0, 8
  %v39 = vld [vmem:[%s0] sm:$0x3]
  %v40 = vlaneseq
  %v41 = vand.u32 %v40, 127
  %v42 = vstv %s38
  %v43 = vadd.s32 %v41, %v42
  %44 = vset.pattern.permute.xlu0 0
  %45 = vperm.xlu0 %44, %v39
  %v46 = vpop.permute.xlu0 %45
  %vm47 = vcmp.lt.s32.totalorder %v43, %v46
  %vm48 = vcmp.lt.s32.totalorder %v43, 8
  %vm49 = vmand %vm47, %vm48
  %v50 = vld [vmem:[%s1] sm:$0x3]
  %v51 = vld [vmem:[%s2] sm:$0x3]
  %v52 = vld [vmem:[%s3] sm:$0x3]
  %v53 = vld [vmem:[%s4] sm:$0x3]
  %v54 = vmax.f32 %v50, 0.0
  %v55 = vmul.f32 %v50, %v52
  %v56 = vsub.f32 %v54, %v55
  %v57 = vand.u32 2147483647, %v50
  %v58 = vsub.f32 0.0, %v57
  %v59 = vmul.f32 %v58, 1.442695
  %v60 = vpow.pop %v59
  %v61 = vadd.f32 %v60, 1.0
  %v62 = vlog2.pop %v61
  %v63 = vmul.f32 %v62, 0.6931472
  %v64 = vmul.f32 -0.5, %v60
  %v65 = vadd.f32 %v64, 1.0
  %v66 = vmul.f32 %v65, %v60
  %v67 = vand.u32 2147483647, %v60
  %vm68 = vcmp.lt.f32.partialorder %v67, 0.0004427343
  %v69 = vsel %vm68, %v66, %v63
  %v70 = vadd.f32 %v56, %v69
  %v71 = vsel %vm49, %v70, 0.0
  %vm72 = vcmask 58368
  %v73 = vsel %vm72, %v71, 0.0
  %74 = vadd.xlane.f32.xlu0 %v73
  %v75 = vpop.xlane.xlu0 %74
  %v76 = vrot.slane %v75, 4
  %v77 = vadd.f32 %v75, %v76
  %v78 = vrot.slane %v77, 2
  %v79 = vadd.f32 %v77, %v78
  %v80 = vrot.slane %v79, 1
  %v81 = vadd.f32 %v79, %v80
  %s82 = vtos %v81
  %v83 = vsub.f32 %v51, %v53
  %v84 = vmul.f32 %v83, %v83
  %v85 = vmul.f32 %v84, %v52
  %v86 = vsel %vm49, %v85, 0.0
  %v87 = vsel %vm72, %v86, 0.0
  %88 = vadd.xlane.f32.xlu0 %v87
  %v89 = vpop.xlane.xlu0 %88
  %v90 = vrot.slane %v89, 4
  %v91 = vadd.f32 %v89, %v90
  %v92 = vrot.slane %v91, 2
  %v93 = vadd.f32 %v91, %v92
  %v94 = vrot.slane %v93, 1
  %v95 = vadd.f32 %v93, %v94
  %s96 = vtos %v95
  %v97 = vadd.s32 %v41, 128
  %s98 = smul.u32 0, 256
  %v99 = vstv %s98
  %v100 = vadd.s32 %v41, %v99
  %v101 = vadd.s32 %v97, %v99
  %v102 = vmul.u32 %v39, 32
  %103 = vset.pattern.permute.xlu0 0
  %104 = vperm.xlu0 %103, %v102
  %v105 = vpop.permute.xlu0 %104
  %vm106 = vcmp.lt.s32.totalorder %v100, %v105
  %vm107 = vcmp.lt.s32.totalorder %v101, %v105
  %vm108 = vcmp.lt.s32.totalorder %v100, 256
  %vm109 = vcmp.lt.s32.totalorder %v101, 256
  %vm110 = vmand %vm106, %vm108
  %vm111 = vmand %vm107, %vm109
  %v112 = vld [vmem:[%s5] sm:$0xf]
  %v113 = vld [vmem:[%s6] sm:$0xf]
  %v114 = vsub.f32 %v112, %v113
  %v115 = vmul.f32 %v114, %v114
  %v118 = vunpack.c.l.s4 1983009808
  %v119 = vunpack.c.0.s8 %v118
  %v120 = vlaneseq
  %v121 = vshrl.u32 %v120, 7
  %v122 = vsub.s32 %v119, %v121
  %v123 = vrot.slane %v115, %v122
  %v124 = vcombine.high %v123, %v123
  %v127 = vsel %vm110, %v123, 0.0
  %v128 = vsel %vm111, %v124, 0.0
  %vm129 = vcmask 1041408
  %v130 = vsel %vm129, %v127, 0.0
  %v131 = vsel %vm129, %v128, 0.0
  %v132 = vadd.f32 %v130, %v131
  %133 = vadd.xlane.f32.xlu0 %v132
  %v134 = vpop.xlane.xlu0 %133
  %v135 = vrot.slane %v134, 4
  %v136 = vadd.f32 %v134, %v135
  %v137 = vrot.slane %v136, 2
  %v138 = vadd.f32 %v136, %v137
  %v139 = vrot.slane %v138, 1
  %v140 = vadd.f32 %v138, %v139
  %s141 = vtos %v140
  %s142 = smul.u32 0, 32
  %v143 = vstv %s142
  %v144 = vadd.s32 %v41, %v143
  %v145 = vmul.u32 %v39, 4
  %146 = vset.pattern.permute.xlu0 0
  %147 = vperm.xlu0 %146, %v145
  %v148 = vpop.permute.xlu0 %147
  %vm149 = vcmp.lt.s32.totalorder %v144, %v148
  %vm150 = vcmp.lt.s32.totalorder %v144, 32
  %vm151 = vmand %vm149, %vm150
  %v152 = vld [vmem:[%s7] sm:$0x3]
  %v153 = vld [vmem:[%s8] sm:$0x3]
  %v154 = vmax.f32 %v152, 0.0
  %v155 = vmul.f32 %v152, %v153
  %v156 = vsub.f32 %v154, %v155
  %v157 = vand.u32 2147483647, %v152
  %v158 = vsub.f32 0.0, %v157
  %v159 = vmul.f32 %v158, 1.442695
  %v160 = vpow.pop %v159
  %v161 = vadd.f32 %v160, 1.0
  %v162 = vlog2.pop %v161
  %v163 = vmul.f32 %v162, 0.6931472
  %v164 = vmul.f32 -0.5, %v160
  %v165 = vadd.f32 %v164, 1.0
  %v166 = vmul.f32 %v165, %v160
  %v167 = vand.u32 2147483647, %v160
  %vm168 = vcmp.lt.f32.partialorder %v167, 0.0004427343
  %v169 = vsel %vm168, %v166, %v163
  %v170 = vadd.f32 %v156, %v169
  %v171 = vsel %vm151, %v170, 0.0
  %vm172 = vcmask 254976
  %v173 = vsel %vm172, %v171, 0.0
  %174 = vadd.xlane.f32.xlu0 %v173
  %v175 = vpop.xlane.xlu0 %174
  %v176 = vrot.slane %v175, 4
  %v177 = vadd.f32 %v175, %v176
  %v178 = vrot.slane %v177, 2
  %v179 = vadd.f32 %v177, %v178
  %v180 = vrot.slane %v179, 1
  %v181 = vadd.f32 %v179, %v180
  %s182 = vtos %v181
  %v183 = vld [vmem:[%s9] sm:$0x3]
  %v184 = vld [vmem:[%s10] sm:$0x3]
  %v185 = vsub.f32 %v183, %v184
  %v186 = vmul.f32 %v185, %v185
  %v187 = vmul.f32 %v186, %v153
  %v188 = vsel %vm151, %v187, 0.0
  %v189 = vsel %vm172, %v188, 0.0
  %190 = vadd.xlane.f32.xlu0 %v189
  %v191 = vpop.xlane.xlu0 %190
  %v192 = vrot.slane %v191, 4
  %v193 = vadd.f32 %v191, %v192
  %v194 = vrot.slane %v193, 2
  %v195 = vadd.f32 %v193, %v194
  %v196 = vrot.slane %v195, 1
  %v197 = vadd.f32 %v195, %v196
  %s198 = vtos %v197
  %vm199 = vcmp.eq.s32.totalorder %v41, 0
  %vm200 = vcmp.eq.s32.totalorder %v41, 1
  %vm201 = vcmp.eq.s32.totalorder %v41, 2
  %vm202 = vcmp.eq.s32.totalorder %v41, 3
  %vm203 = vcmp.eq.s32.totalorder %v41, 4
  %v204 = vstv %s198
  %v205 = vsel %vm203, %v204, 0.0
  %v206 = vstv %s182
  %v207 = vsel %vm202, %v206, %v205
  %v208 = vstv %s141
  %v209 = vsel %vm201, %v208, %v207
  %v210 = vstv %s96
  %v211 = vsel %vm200, %v210, %v209
  %v212 = vstv %s82
  %v213 = vsel %vm199, %v212, %v211
  %214 = vst [vmem:[%s11] sm:$0x1] %v213
  // Predicated region
  $region46: #{world_loss.1} parent=0 // pred_check
    _
  $region47: #{world_loss.1} parent=0 // pred_check_branch
    %216 = sbr.rel (0) target = $region49
  $region48: #{world_loss.1} parent=0 // pred_region
    _
  $region49: #{world_loss.1} parent=0 // pred_fallthru
    _
  // Predicated region
  $region50: #{world_loss.1} parent=0 // pred_check
    _
  $region51: #{world_loss.1} parent=0 // pred_check_branch
    %218 = sbr.rel (0) target = $region53
  $region52: #{world_loss.1} parent=0 // pred_region
    _
  $region53: #{world_loss.1} parent=0 // pred_fallthru
    _

</llo_original>
